<compile_context>
chip_gen: v6e
topology: v6e:2x2x1
jax: 0.10.0
libtpu: 0.0.40
codegen_flags: <defaults>
</compile_context>

<pallas_src>
import jax
import jax.numpy as jnp
import numpy as np
from jax.experimental import pallas as pl
from jax.experimental.pallas import tpu as pltpu


# -----------------------------------------------------------------------------
# Pass 1: streamed per-sample reduction (seq-sum + OOI-decision statistics)
# -----------------------------------------------------------------------------
def _make_stats_kernel(true_seq_len, tile_s):
    needs_mask = (true_seq_len % tile_s) != 0

    def _stats_kernel(h_ref, bvec_ref, hid_sum_ref, diff_ref, bado_ref):
        s = pl.program_id(1)

        h = h_ref[...].astype(jnp.float32)            # (1, TS, D)
        bv = bvec_ref[...].astype(jnp.float32)        # (1, D)

        part_sum = jnp.sum(h, axis=1, keepdims=True)  # (1, 1, D)

        # new_ss - orig_ss = 2*(h . bv) + ||bv||^2  (no (1,TS,D) h2 temp)
        orig_ss = jnp.sum(h * h, axis=-1, keepdims=True)             # (1, TS, 1)
        dot = jnp.sum(h * bv[:, None, :], axis=-1, keepdims=True)    # (1, TS, 1)
        bv_ss = jnp.sum(bv * bv)                                     # scalar
        diff = 2.0 * dot + bv_ss                                     # (1, TS, 1)
        new_ss = orig_ss + diff
        # Fold "h+bv non-finite" into diff: +inf forces the do_norm decision.
        diff = jnp.where(jnp.isfinite(new_ss), diff, jnp.inf)
        bad_orig = jnp.where(jnp.isfinite(orig_ss), 0.0, 1.0)

        if needs_mask:
            # Padded (zero) rows: keep them out of the OOI decision. They
            # contribute 0 to part_sum already.
            row = s * tile_s + jax.lax.broadcasted_iota(
                jnp.int32, (1, tile_s, 1), 1)
            valid = row < true_seq_len
            diff = jnp.where(valid, diff, -jnp.inf)
            bad_orig = jnp.where(valid, bad_orig, 0.0)

        diff_max = jnp.max(diff, axis=1, keepdims=True)       # (1, 1, 1)
        bado_max = jnp.max(bad_orig, axis=1, keepdims=True)   # (1, 1, 1)

        @pl.when(s == 0)
        def _():
            hid_sum_ref[...] = jnp.zeros(hid_sum_ref.shape, hid_sum_ref.dtype)
            diff_ref[...] = jnp.full(diff_ref.shape, -jnp.inf, diff_ref.dtype)
            bado_ref[...] = jnp.zeros(bado_ref.shape, bado_ref.dtype)

        hid_sum_ref[...] += part_sum
        diff_ref[...] = jnp.maximum(diff_ref[...], diff_max)
        bado_ref[...] = jnp.maximum(bado_ref[...], bado_max)

    return _stats_kernel


# -----------------------------------------------------------------------------
# Pass 2: streamed apply (behavior add + conditional OOI rescale)
# flags layout (int32, SMEM scalar prefetch): [do_norm, met_0, ..., met_{B-1}]
# -----------------------------------------------------------------------------
def _apply_kernel(flags_ref, h_ref, bvec_ref, out_ref):
    b = pl.program_id(0)
    do_norm = flags_ref[0]
    met = flags_ref[b + 1]

    @pl.when(met == 0)
    def _():
        # Behavior not applied -> new_norm == orig_norm -> rescale is exactly 1.
        out_ref[...] = h_ref[...]

    @pl.when(jnp.logical_and(met != 0, do_norm == 0))
    def _():
        bv = bvec_ref[...].astype(out_ref.dtype)               # (1, D)
        out_ref[...] = (h_ref[...] + bv[:, None, :]).astype(out_ref.dtype)

    @pl.when(jnp.logical_and(met != 0, do_norm != 0))
    def _():
        h = h_ref[...].astype(jnp.float32)                     # (1, TS, D)
        bv = bvec_ref[...].astype(jnp.float32)                 # (1, D)
        bvb = bv[:, None, :]
        h2 = h + bvb
        orig_ss = jnp.sum(h * h, axis=-1, keepdims=True)       # (1, TS, 1)
        dot = jnp.sum(h * bvb, axis=-1, keepdims=True)         # (1, TS, 1)
        new_ss = orig_ss + 2.0 * dot + jnp.sum(bv * bv)
        scale = jnp.sqrt(orig_ss) * jax.lax.rsqrt(new_ss)      # rsqrt -> EUP slot
        out_ref[...] = (h2 * scale).astype(out_ref.dtype)


# -----------------------------------------------------------------------------
# Tiling / VMEM budget helpers
# -----------------------------------------------------------------------------
def _vmem_budget():
    """(target tile bytes, vmem_limit_bytes) — conservative unless VMEM>=128MiB."""
    target, limit = 2 * 1024 * 1024, 32 * 1024 * 1024   # safe on v7x (64 MiB VMEM)
    try:
        info = pltpu.get_tpu_info()
        if getattr(info, "vmem_capacity_bytes", 0) >= 128 * 1024 * 1024:
            target, limit = 4 * 1024 * 1024, 64 * 1024 * 1024   # v5e / v6e headroom
    except Exception:
        pass
    return target, limit


def _pick_seq_tile(seq_len, hidden_dim, dtype, target_bytes):
    """Bounded seq-tile: sublane-multiple step, never exceeds the byte budget."""
    itemsize = jnp.dtype(dtype).itemsize
    step = max(8, 32 // itemsize)                      # 8 f32, 16 bf16, 32 int8/fp8
    bytes_per_row = max(1, hidden_dim * itemsize)
    cap = max(step, (target_bytes // bytes_per_row) // step * step)
    if seq_len <= cap:
        return ((seq_len + step - 1) // step) * step   # single (possibly padded) tile
    best = None
    t = step
    while t <= cap:
        if seq_len % t == 0:
            best = t
        t += step
    return best if best is not None else cap           # padding + masking path


# -----------------------------------------------------------------------------
# Wrapper
# -----------------------------------------------------------------------------
def leash_forward(hidden_states, condition_projector, behavior_vector, threshold):
    """hidden_states: (B, S, D); condition_projector: (D, D); behavior_vector: (D,)."""
    B, S, D = hidden_states.shape
    dtype = hidden_states.dtype
    bvec = behavior_vector.reshape(1, D).astype(dtype)

    target_bytes, vmem_limit = _vmem_budget()
    ts = _pick_seq_tile(S, D, dtype, target_bytes)
    s_pad = pl.cdiv(S, ts) * ts
    n_s = s_pad // ts

    h = hidden_states
    if s_pad != S:
        h = jnp.pad(hidden_states, ((0, 0), (0, s_pad - S), (0, 0)))

    # ---- Pass 1: streamed per-sample statistics -----------------------------
    h_spec = pl.BlockSpec((1, ts, D), lambda b, s: (b, s, 0))
    bvec_spec = pl.BlockSpec((1, D), lambda b, s: (0, 0))
    acc_d = pl.BlockSpec((1, 1, D), lambda b, s: (b, 0, 0))
    acc_1 = pl.BlockSpec((1, 1, 1), lambda b, s: (b, 0, 0))

    hid_sum, diff_max, bad_orig = pl.pallas_call(
        _make_stats_kernel(S, ts),
        out_shape=(
            jax.ShapeDtypeStruct((B, 1, D), jnp.float32),
            jax.ShapeDtypeStruct((B, 1, 1), jnp.float32),
            jax.ShapeDtypeStruct((B, 1, 1), jnp.float32),
        ),
        grid_spec=pltpu.PrefetchScalarGridSpec(
            num_scalar_prefetch=0,
            grid=(B, n_s),
            in_specs=[h_spec, bvec_spec],
            out_specs=[acc_d, acc_1, acc_1],
        ),
        compiler_params=pltpu.CompilerParams(
            dimension_semantics=("parallel", "arbitrary"),
            vmem_limit_bytes=vmem_limit,
        ),
    )(h, bvec)

    # ---- Condition + global OOI decision (tiny; plain JAX — the (D,D)
    # ---- projector never enters the streaming kernels' VMEM budget) ----------
    hid = hid_sum[:, 0, :] / jnp.float32(S)                             # (B, D)
    projected = jnp.tanh(hid @ condition_projector.T.astype(jnp.float32))
    num = jnp.sum(hid * projected, axis=-1)
    den = (jnp.sqrt(jnp.sum(hid * hid, axis=-1)) *
           jnp.sqrt(jnp.sum(projected * projected, axis=-1)))
    sim = num / den
    # condition_comparator_threshold_is == 'larger'  =>  met = sim < threshold
    met = sim < jnp.asarray(threshold, jnp.float32)                     # (B,)
    diff = diff_max[:, 0, 0]
    bado = bad_orig[:, 0, 0]
    do_norm = jnp.any((met & (diff > 0.0)) | (~met & (bado > 0.0)))
    flags = jnp.concatenate(
        [do_norm.astype(jnp.int32).reshape(1), met.astype(jnp.int32)])  # (B+1,)

    # ---- Pass 2: streamed apply — skipped entirely when nothing met ---------
    h_spec2 = pl.BlockSpec((1, ts, D), lambda b, s, flags_ref: (b, s, 0))
    bvec_spec2 = pl.BlockSpec((1, D), lambda b, s, flags_ref: (0, 0))

    def _run_pass2(h_in):
        return pl.pallas_call(
            _apply_kernel,
            out_shape=jax.ShapeDtypeStruct((B, s_pad, D), dtype),
            grid_spec=pltpu.PrefetchScalarGridSpec(
                num_scalar_prefetch=1,
                grid=(B, n_s),
                in_specs=[h_spec2, bvec_spec2],
                out_specs=h_spec2,
            ),
            compiler_params=pltpu.CompilerParams(
                dimension_semantics=("parallel", "parallel"),
                vmem_limit_bytes=vmem_limit,
            ),
        )(flags, h_in, bvec)

    out = jax.lax.cond(jnp.any(met), _run_pass2, lambda x: x, h)
    if s_pad != S:
        out = out[:, :S, :]
    return out


def leash_reference(h, proj, bvec, thr):
    """Pure-JAX reference mirroring the PyTorch forward."""
    orig_norm = jnp.linalg.norm(h, axis=-1, keepdims=True)
    hid = h.mean(axis=1)
    projected = jnp.tanh(hid @ proj.T)
    sim = (jnp.sum(hid * projected, axis=-1, keepdims=True) /
           (jnp.linalg.norm(hid, axis=-1, keepdims=True) *
            jnp.linalg.norm(projected, axis=-1, keepdims=True)))
    met = sim < thr
    h2 = jnp.where(met[:, :, None], h + bvec[None, None, :], h)
    new_norm = jnp.linalg.norm(h2, axis=-1, keepdims=True)
    max_ratio = jnp.max(new_norm / orig_norm)
    bad = jnp.any(jnp.isnan(h2)) | jnp.any(jnp.isinf(h2))
    return jnp.where((max_ratio > 1.0) | bad, h2 * (orig_norm / new_norm), h2)


if __name__ == "__main__":
    B, S, D = 2, 8, 128          # batch, seq, hidden

    key = jax.random.PRNGKey(0)
    k_h, k_p, k_b = jax.random.split(key, 3)
    hidden_states = jax.random.normal(k_h, (B, S, D), dtype=jnp.float32)
    condition_projector = 0.05 * jax.random.normal(k_p, (D, D), dtype=jnp.float32)
    behavior_vector = 0.1 * jax.random.normal(k_b, (D,), dtype=jnp.float32)

    fwd = jax.jit(leash_forward)

    # Exercise the no-met (fast-path skip), mixed, and all-met (do_norm) paths.
    for threshold in (-1.0, 0.0, 1.0):
        out = jax.block_until_ready(
            fwd(hidden_states, condition_projector, behavior_vector,
                jnp.float32(threshold)))
        ref = leash_reference(hidden_states, condition_projector, behavior_vector,
                              threshold)
        np.testing.assert_allclose(np.asarray(out), np.asarray(ref),
                                   rtol=1e-5, atol=1e-5)

    # Exercise the padded / masked-tile path (S not a sublane multiple, B=1).
    h_small = jax.random.normal(jax.random.PRNGKey(1), (1, 12, D),
                                dtype=jnp.float32)
    for threshold in (-1.0, 1.0):
        out = jax.block_until_ready(
            fwd(h_small, condition_projector, behavior_vector,
                jnp.float32(threshold)))
        ref = leash_reference(h_small, condition_projector, behavior_vector,
                              threshold)
        np.testing.assert_allclose(np.asarray(out), np.asarray(ref),
                                   rtol=1e-5, atol=1e-5)

    print("KERNEL_OK")
</pallas_src>

<mosaic_0001>
module attributes {stable_mosaic.version = 11 : i64} {
  func.func @_stats_kernel(%arg0: i32, %arg1: i32, %arg2: memref<1x8x128xf32, #tpu.memory_space<vmem>>, %arg3: memref<1x128xf32, #tpu.memory_space<vmem>>, %arg4: memref<1x1x128xf32, #tpu.memory_space<vmem>>, %arg5: memref<1x1x1xf32, #tpu.memory_space<vmem>>, %arg6: memref<1x1x1xf32, #tpu.memory_space<vmem>>) attributes {dimension_semantics = [#tpu.dimension_semantics<parallel>, #tpu.dimension_semantics<arbitrary>], iteration_bounds = array<i64: 2, 1>, scalar_prefetch = 0 : i64, scratch_operands = 0 : i64, tpu.core_type = #tpu.core_type<tc>, window_params = [{transform_indices = @transform_0, window_bounds = array<i64: 1, 8, 128>}, {pipeline_mode = #tpu.pipeline_mode<synchronous>, transform_indices = @transform_1, window_bounds = array<i64: 1, 128>}, {transform_indices = @transform_2, window_bounds = array<i64: 1, 1, 128>}, {transform_indices = @transform_3, window_bounds = array<i64: 1, 1, 1>}, {transform_indices = @transform_4, window_bounds = array<i64: 1, 1, 1>}]} {
    %c0 = arith.constant 0 : index
    %c0_0 = arith.constant 0 : index
    %c0_1 = arith.constant 0 : index
    %0 = vector.load %arg2[%c0, %c0_0, %c0_1] : memref<1x8x128xf32, #tpu.memory_space<vmem>>, vector<1x8x128xf32>
    %c0_2 = arith.constant 0 : index
    %c0_3 = arith.constant 0 : index
    %1 = vector.load %arg3[%c0_2, %c0_3] : memref<1x128xf32, #tpu.memory_space<vmem>>, vector<1x128xf32>
    %cst = arith.constant dense<0.000000e+00> : vector<1x128xf32>
    %2 = vector.multi_reduction <add>, %0, %cst [1] : vector<1x8x128xf32> to vector<1x128xf32>
    %3 = vector.shape_cast %2 : vector<1x128xf32> to vector<1x1x128xf32>
    %4 = arith.mulf %0, %0 : vector<1x8x128xf32>
    %cst_4 = arith.constant dense<0.000000e+00> : vector<1x8xf32>
    %5 = vector.multi_reduction <add>, %4, %cst_4 [2] : vector<1x8x128xf32> to vector<1x8xf32>
    %6 = vector.shape_cast %5 : vector<1x8xf32> to vector<1x8x1xf32>
    %7 = vector.shape_cast %1 : vector<1x128xf32> to vector<1x1x128xf32>
    %8 = vector.broadcast %7 : vector<1x1x128xf32> to vector<1x8x128xf32>
    %9 = arith.mulf %0, %8 : vector<1x8x128xf32>
    %cst_5 = arith.constant dense<0.000000e+00> : vector<1x8xf32>
    %10 = vector.multi_reduction <add>, %9, %cst_5 [2] : vector<1x8x128xf32> to vector<1x8xf32>
    %11 = vector.shape_cast %10 : vector<1x8xf32> to vector<1x8x1xf32>
    %12 = arith.mulf %1, %1 : vector<1x128xf32>
    %13 = vector.shape_cast %12 : vector<1x128xf32> to vector<1x1x128xf32>
    %cst_6 = arith.constant dense<0.000000e+00> : vector<1xf32>
    %14 = vector.multi_reduction <add>, %13, %cst_6 [1, 2] : vector<1x1x128xf32> to vector<1xf32>
    %15 = vector.shape_cast %14 : vector<1xf32> to vector<1x1x1xf32>
    %16 = vector.extract %15[0, 0, 0] : f32 from vector<1x1x1xf32>
    %cst_7 = arith.constant 2.000000e+00 : f32
    %17 = vector.broadcast %cst_7 : f32 to vector<1x8x1xf32>
    %18 = arith.mulf %17, %11 : vector<1x8x1xf32>
    %19 = vector.broadcast %16 : f32 to vector<1x8x1xf32>
    %20 = arith.addf %18, %19 : vector<1x8x1xf32>
    %21 = arith.addf %6, %20 : vector<1x8x1xf32>
    %22 = tpu.weird %21 : vector<1x8x1xf32> -> vector<1x8x1xi1>
    %cst_8 = arith.constant dense<true> : vector<1x8x1xi1>
    %23 = arith.xori %22, %cst_8 : vector<1x8x1xi1>
    %cst_9 = arith.constant 0x7F800000 : f32
    %24 = vector.broadcast %cst_9 : f32 to vector<1x8x1xf32>
    %25 = arith.select %23, %20, %24 : vector<1x8x1xi1>, vector<1x8x1xf32>
    %26 = tpu.weird %6 : vector<1x8x1xf32> -> vector<1x8x1xi1>
    %cst_10 = arith.constant dense<true> : vector<1x8x1xi1>
    %27 = arith.xori %26, %cst_10 : vector<1x8x1xi1>
    %cst_11 = arith.constant 0.000000e+00 : f32
    %cst_12 = arith.constant 1.000000e+00 : f32
    %28 = vector.broadcast %cst_11 : f32 to vector<1x8x1xf32>
    %29 = vector.broadcast %cst_12 : f32 to vector<1x8x1xf32>
    %30 = arith.select %27, %28, %29 : vector<1x8x1xi1>, vector<1x8x1xf32>
    %cst_13 = arith.constant dense<0xFF800000> : vector<1x1xf32>
    %31 = vector.multi_reduction <maximumf>, %25, %cst_13 [1] : vector<1x8x1xf32> to vector<1x1xf32>
    %32 = vector.shape_cast %31 : vector<1x1xf32> to vector<1x1x1xf32>
    %cst_14 = arith.constant dense<0xFF800000> : vector<1x1xf32>
    %33 = vector.multi_reduction <maximumf>, %30, %cst_14 [1] : vector<1x8x1xf32> to vector<1x1xf32>
    %34 = vector.shape_cast %33 : vector<1x1xf32> to vector<1x1x1xf32>
    %c0_i32 = arith.constant 0 : i32
    %35 = arith.cmpi eq, %arg1, %c0_i32 : i32
    %36 = arith.extui %35 : i1 to i32
    %c0_i32_15 = arith.constant 0 : i32
    %37 = arith.cmpi ne, %36, %c0_i32_15 : i32
    scf.if %37 {
      %cst_34 = arith.constant 0.000000e+00 : f32
      %47 = vector.broadcast %cst_34 : f32 to vector<1x1x128xf32>
      %c0_35 = arith.constant 0 : index
      %c0_36 = arith.constant 0 : index
      %c0_37 = arith.constant 0 : index
      %48 = vector.load %arg4[%c0_35, %c0_36, %c0_37] : memref<1x1x128xf32, #tpu.memory_space<vmem>>, vector<1x1x128xf32>
      tpu.vector_store %arg4[%c0_35, %c0_36, %c0_37], %47 {strides = array<i32>} : memref<1x1x128xf32, #tpu.memory_space<vmem>>, vector<1x1x128xf32>,
      %cst_38 = arith.constant 0xFF800000 : f32
      %49 = vector.broadcast %cst_38 : f32 to vector<1x1x1xf32>
      %c0_39 = arith.constant 0 : index
      %c0_40 = arith.constant 0 : index
      %c0_41 = arith.constant 0 : index
      %50 = vector.load %arg5[%c0_39, %c0_40, %c0_41] : memref<1x1x1xf32, #tpu.memory_space<vmem>>, vector<1x1x1xf32>
      tpu.vector_store %arg5[%c0_39, %c0_40, %c0_41], %49 {strides = array<i32>} : memref<1x1x1xf32, #tpu.memory_space<vmem>>, vector<1x1x1xf32>,
      %cst_42 = arith.constant 0.000000e+00 : f32
      %51 = vector.broadcast %cst_42 : f32 to vector<1x1x1xf32>
      %c0_43 = arith.constant 0 : index
      %c0_44 = arith.constant 0 : index
      %c0_45 = arith.constant 0 : index
      %52 = vector.load %arg6[%c0_43, %c0_44, %c0_45] : memref<1x1x1xf32, #tpu.memory_space<vmem>>, vector<1x1x1xf32>
      tpu.vector_store %arg6[%c0_43, %c0_44, %c0_45], %51 {strides = array<i32>} : memref<1x1x1xf32, #tpu.memory_space<vmem>>, vector<1x1x1xf32>,
    } else {
    }
    %c0_16 = arith.constant 0 : index
    %c0_17 = arith.constant 0 : index
    %c0_18 = arith.constant 0 : index
    %38 = vector.load %arg4[%c0_16, %c0_17, %c0_18] : memref<1x1x128xf32, #tpu.memory_space<vmem>>, vector<1x1x128xf32>
    %39 = arith.addf %38, %3 : vector<1x1x128xf32>
    %c0_19 = arith.constant 0 : index
    %c0_20 = arith.constant 0 : index
    %c0_21 = arith.constant 0 : index
    %40 = vector.load %arg4[%c0_19, %c0_20, %c0_21] : memref<1x1x128xf32, #tpu.memory_space<vmem>>, vector<1x1x128xf32>
    tpu.vector_store %arg4[%c0_19, %c0_20, %c0_21], %39 {strides = array<i32>} : memref<1x1x128xf32, #tpu.memory_space<vmem>>, vector<1x1x128xf32>,
    %c0_22 = arith.constant 0 : index
    %c0_23 = arith.constant 0 : index
    %c0_24 = arith.constant 0 : index
    %41 = vector.load %arg5[%c0_22, %c0_23, %c0_24] : memref<1x1x1xf32, #tpu.memory_space<vmem>>, vector<1x1x1xf32>
    %42 = arith.maximumf %41, %32 : vector<1x1x1xf32>
    %c0_25 = arith.constant 0 : index
    %c0_26 = arith.constant 0 : index
    %c0_27 = arith.constant 0 : index
    %43 = vector.load %arg5[%c0_25, %c0_26, %c0_27] : memref<1x1x1xf32, #tpu.memory_space<vmem>>, vector<1x1x1xf32>
    tpu.vector_store %arg5[%c0_25, %c0_26, %c0_27], %42 {strides = array<i32>} : memref<1x1x1xf32, #tpu.memory_space<vmem>>, vector<1x1x1xf32>,
    %c0_28 = arith.constant 0 : index
    %c0_29 = arith.constant 0 : index
    %c0_30 = arith.constant 0 : index
    %44 = vector.load %arg6[%c0_28, %c0_29, %c0_30] : memref<1x1x1xf32, #tpu.memory_space<vmem>>, vector<1x1x1xf32>
    %45 = arith.maximumf %44, %34 : vector<1x1x1xf32>
    %c0_31 = arith.constant 0 : index
    %c0_32 = arith.constant 0 : index
    %c0_33 = arith.constant 0 : index
    %46 = vector.load %arg6[%c0_31, %c0_32, %c0_33] : memref<1x1x1xf32, #tpu.memory_space<vmem>>, vector<1x1x1xf32>
    tpu.vector_store %arg6[%c0_31, %c0_32, %c0_33], %45 {strides = array<i32>} : memref<1x1x1xf32, #tpu.memory_space<vmem>>, vector<1x1x1xf32>,
    return
  }
  func.func @transform_0(%arg0: i32, %arg1: i32) -> (i32, i32, i32) {
    %c0_i32 = arith.constant 0 : i32
    %c0_i32_0 = arith.constant 0 : i32
    return %arg0, %arg1, %c0_i32 : i32, i32, i32
  }
  func.func @transform_1(%arg0: i32, %arg1: i32) -> (i32, i32) {
    %c0_i32 = arith.constant 0 : i32
    %c0_i32_0 = arith.constant 0 : i32
    %c0_i32_1 = arith.constant 0 : i32
    return %c0_i32, %c0_i32_0 : i32, i32
  }
  func.func @transform_2(%arg0: i32, %arg1: i32) -> (i32, i32, i32) {
    %c0_i32 = arith.constant 0 : i32
    %c0_i32_0 = arith.constant 0 : i32
    %c0_i32_1 = arith.constant 0 : i32
    return %arg0, %c0_i32, %c0_i32_0 : i32, i32, i32
  }
  func.func @transform_3(%arg0: i32, %arg1: i32) -> (i32, i32, i32) {
    %c0_i32 = arith.constant 0 : i32
    %c0_i32_0 = arith.constant 0 : i32
    %c0_i32_1 = arith.constant 0 : i32
    return %arg0, %c0_i32, %c0_i32_0 : i32, i32, i32
  }
  func.func @transform_4(%arg0: i32, %arg1: i32) -> (i32, i32, i32) {
    %c0_i32 = arith.constant 0 : i32
    %c0_i32_0 = arith.constant 0 : i32
    %c0_i32_1 = arith.constant 0 : i32
    return %arg0, %c0_i32, %c0_i32_0 : i32, i32, i32
  }
}

module attributes {stable_mosaic.version = 11 : i64} {
  func.func @_apply_kernel(%arg0: i32, %arg1: i32, %arg2: memref<3xi32, #tpu.memory_space<smem>>, %arg3: memref<1x8x128xf32, #tpu.memory_space<vmem>>, %arg4: memref<1x128xf32, #tpu.memory_space<vmem>>, %arg5: memref<1x8x128xf32, #tpu.memory_space<vmem>>) attributes {dimension_semantics = [#tpu.dimension_semantics<parallel>, #tpu.dimension_semantics<parallel>], iteration_bounds = array<i64: 2, 1>, scalar_prefetch = 1 : i64, scratch_operands = 0 : i64, tpu.core_type = #tpu.core_type<tc>, window_params = [{transform_indices = @transform_0, window_bounds = array<i64: 1, 8, 128>}, {pipeline_mode = #tpu.pipeline_mode<synchronous>, transform_indices = @transform_1, window_bounds = array<i64: 1, 128>}, {transform_indices = @transform_2, window_bounds = array<i64: 1, 8, 128>}]} {
    %c0 = arith.constant 0 : index
    %0 = memref.load %arg2[%c0] : memref<3xi32, #tpu.memory_space<smem>>
    %c1_i32 = arith.constant 1 : i32
    %1 = arith.addi %arg0, %c1_i32 : i32
    %2 = arith.index_cast %1 : i32 to index
    %3 = memref.load %arg2[%2] : memref<3xi32, #tpu.memory_space<smem>>
    %c0_i32 = arith.constant 0 : i32
    %4 = arith.cmpi eq, %3, %c0_i32 : i32
    %5 = arith.extui %4 : i1 to i32
    %c0_i32_0 = arith.constant 0 : i32
    %6 = arith.cmpi ne, %5, %c0_i32_0 : i32
    scf.if %6 {
      %c0_7 = arith.constant 0 : index
      %c0_8 = arith.constant 0 : index
      %c0_9 = arith.constant 0 : index
      %17 = vector.load %arg3[%c0_7, %c0_8, %c0_9] : memref<1x8x128xf32, #tpu.memory_space<vmem>>, vector<1x8x128xf32>
      %c0_10 = arith.constant 0 : index
      %c0_11 = arith.constant 0 : index
      %c0_12 = arith.constant 0 : index
      %18 = vector.load %arg5[%c0_10, %c0_11, %c0_12] : memref<1x8x128xf32, #tpu.memory_space<vmem>>, vector<1x8x128xf32>
      tpu.vector_store %arg5[%c0_10, %c0_11, %c0_12], %17 {strides = array<i32>} : memref<1x8x128xf32, #tpu.memory_space<vmem>>, vector<1x8x128xf32>,
    } else {
    }
    %c0_i32_1 = arith.constant 0 : i32
    %7 = arith.cmpi ne, %3, %c0_i32_1 : i32
    %c0_i32_2 = arith.constant 0 : i32
    %8 = arith.cmpi eq, %0, %c0_i32_2 : i32
    %9 = arith.andi %7, %8 : i1
    %10 = arith.extui %9 : i1 to i32
    %c0_i32_3 = arith.constant 0 : i32
    %11 = arith.cmpi ne, %10, %c0_i32_3 : i32
    scf.if %11 {
      %c0_7 = arith.constant 0 : index
      %c0_8 = arith.constant 0 : index
      %17 = vector.load %arg4[%c0_7, %c0_8] : memref<1x128xf32, #tpu.memory_space<vmem>>, vector<1x128xf32>
      %c0_9 = arith.constant 0 : index
      %c0_10 = arith.constant 0 : index
      %c0_11 = arith.constant 0 : index
      %18 = vector.load %arg3[%c0_9, %c0_10, %c0_11] : memref<1x8x128xf32, #tpu.memory_space<vmem>>, vector<1x8x128xf32>
      %19 = vector.shape_cast %17 : vector<1x128xf32> to vector<1x1x128xf32>
      %20 = vector.broadcast %19 : vector<1x1x128xf32> to vector<1x8x128xf32>
      %21 = arith.addf %18, %20 : vector<1x8x128xf32>
      %c0_12 = arith.constant 0 : index
      %c0_13 = arith.constant 0 : index
      %c0_14 = arith.constant 0 : index
      %22 = vector.load %arg5[%c0_12, %c0_13, %c0_14] : memref<1x8x128xf32, #tpu.memory_space<vmem>>, vector<1x8x128xf32>
      tpu.vector_store %arg5[%c0_12, %c0_13, %c0_14], %21 {strides = array<i32>} : memref<1x8x128xf32, #tpu.memory_space<vmem>>, vector<1x8x128xf32>,
    } else {
    }
    %c0_i32_4 = arith.constant 0 : i32
    %12 = arith.cmpi ne, %3, %c0_i32_4 : i32
    %c0_i32_5 = arith.constant 0 : i32
    %13 = arith.cmpi ne, %0, %c0_i32_5 : i32
    %14 = arith.andi %12, %13 : i1
    %15 = arith.extui %14 : i1 to i32
    %c0_i32_6 = arith.constant 0 : i32
    %16 = arith.cmpi ne, %15, %c0_i32_6 : i32
    scf.if %16 {
      %c0_7 = arith.constant 0 : index
      %c0_8 = arith.constant 0 : index
      %c0_9 = arith.constant 0 : index
      %17 = vector.load %arg3[%c0_7, %c0_8, %c0_9] : memref<1x8x128xf32, #tpu.memory_space<vmem>>, vector<1x8x128xf32>
      %c0_10 = arith.constant 0 : index
      %c0_11 = arith.constant 0 : index
      %18 = vector.load %arg4[%c0_10, %c0_11] : memref<1x128xf32, #tpu.memory_space<vmem>>, vector<1x128xf32>
      %19 = vector.shape_cast %18 : vector<1x128xf32> to vector<1x1x128xf32>
      %20 = vector.broadcast %19 : vector<1x1x128xf32> to vector<1x8x128xf32>
      %21 = arith.addf %17, %20 : vector<1x8x128xf32>
      %22 = arith.mulf %17, %17 : vector<1x8x128xf32>
      %cst = arith.constant dense<0.000000e+00> : vector<1x8xf32>
      %23 = vector.multi_reduction <add>, %22, %cst [2] : vector<1x8x128xf32> to vector<1x8xf32>
      %24 = vector.shape_cast %23 : vector<1x8xf32> to vector<1x8x1xf32>
      %25 = vector.broadcast %19 : vector<1x1x128xf32> to vector<1x8x128xf32>
      %26 = arith.mulf %17, %25 : vector<1x8x128xf32>
      %cst_12 = arith.constant dense<0.000000e+00> : vector<1x8xf32>
      %27 = vector.multi_reduction <add>, %26, %cst_12 [2] : vector<1x8x128xf32> to vector<1x8xf32>
      %28 = vector.shape_cast %27 : vector<1x8xf32> to vector<1x8x1xf32>
      %cst_13 = arith.constant 2.000000e+00 : f32
      %29 = vector.broadcast %cst_13 : f32 to vector<1x8x1xf32>
      %30 = arith.mulf %29, %28 : vector<1x8x1xf32>
      %31 = arith.addf %24, %30 : vector<1x8x1xf32>
      %32 = arith.mulf %18, %18 : vector<1x128xf32>
      %33 = vector.shape_cast %32 : vector<1x128xf32> to vector<1x1x128xf32>
      %cst_14 = arith.constant dense<0.000000e+00> : vector<1xf32>
      %34 = vector.multi_reduction <add>, %33, %cst_14 [1, 2] : vector<1x1x128xf32> to vector<1xf32>
      %35 = vector.shape_cast %34 : vector<1xf32> to vector<1x1x1xf32>
      %36 = vector.extract %35[0, 0, 0] : f32 from vector<1x1x1xf32>
      %37 = vector.broadcast %36 : f32 to vector<1x8x1xf32>
      %38 = arith.addf %31, %37 : vector<1x8x1xf32>
      %39 = math.sqrt %24 : vector<1x8x1xf32>
      %40 = math.rsqrt %38 : vector<1x8x1xf32>
      %41 = arith.mulf %39, %40 : vector<1x8x1xf32>
      %42 = vector.broadcast %41 : vector<1x8x1xf32> to vector<1x8x128xf32>
      %43 = arith.mulf %21, %42 : vector<1x8x128xf32>
      %c0_15 = arith.constant 0 : index
      %c0_16 = arith.constant 0 : index
      %c0_17 = arith.constant 0 : index
      %44 = vector.load %arg5[%c0_15, %c0_16, %c0_17] : memref<1x8x128xf32, #tpu.memory_space<vmem>>, vector<1x8x128xf32>
      tpu.vector_store %arg5[%c0_15, %c0_16, %c0_17], %43 {strides = array<i32>} : memref<1x8x128xf32, #tpu.memory_space<vmem>>, vector<1x8x128xf32>,
    } else {
    }
    return
  }
  func.func @transform_0(%arg0: i32, %arg1: i32, %arg2: memref<3xi32, #tpu.memory_space<smem>>) -> (i32, i32, i32) {
    %c0_i32 = arith.constant 0 : i32
    %c0_i32_0 = arith.constant 0 : i32
    return %arg0, %arg1, %c0_i32 : i32, i32, i32
  }
  func.func @transform_1(%arg0: i32, %arg1: i32, %arg2: memref<3xi32, #tpu.memory_space<smem>>) -> (i32, i32) {
    %c0_i32 = arith.constant 0 : i32
    %c0_i32_0 = arith.constant 0 : i32
    %c0_i32_1 = arith.constant 0 : i32
    return %c0_i32, %c0_i32_0 : i32, i32
  }
  func.func @transform_2(%arg0: i32, %arg1: i32, %arg2: memref<3xi32, #tpu.memory_space<smem>>) -> (i32, i32, i32) {
    %c0_i32 = arith.constant 0 : i32
    %c0_i32_0 = arith.constant 0 : i32
    return %arg0, %arg1, %c0_i32 : i32, i32, i32
  }
}

</mosaic_0001>

<llo_original>
// kernel: branch_1_fun.1
$region0: #{branch_1_fun.1}
  #allocation0 [shape = 'u32[]', space=smem, size = 0x4, offset = 0x4, fixed_abs, tag = 'smem constant byte address 0x4 - core index']
  #allocation1 [shape = 'u32[144,128]{1,0:T(1,128)}', space=vmem, size = 0x12000, scoped, tag = 'internal scratch']
  #allocation2 [shape = 's32[1]{0}', space=sflag, size = 0x4, scoped, tag = 'scoped memory for branch_1_fun.1']
  #allocation3 [shape = 'u8[512]{0}', space=smem, size = 0x200, scoped, tag = 'prefetched SMEM operand 0']
  %s0 = inlined_call_operand.vmem [shape: s32[3], index: 0, kind: input, shape index: {}]
  %s1 = inlined_call_operand.vmem [shape: f32[2,8,128], index: 1, kind: input, shape index: {}]
  %s2 = inlined_call_operand.vmem [shape: f32[1,128], index: 2, kind: input, shape index: {}]
  %s3 = inlined_call_operand.hbm [shape: f32[2,8,128], index: 3, kind: output, shape index: {}]
  %s4 = sld [smem:[#allocation0]]
  $region53: #{branch_1_fun.1} parent=0
    _
  %s6 = ssub.s32 1, %s4
  %s7 = scalar_select 0, %s6, %s4
  %s8 = sshll.u32 %s0, 4
  %s9 = int_to_ptr.vmem [resolvable:$true] %s8
  %11 = dma.vmem_to_smem %s9, 16, [#allocation3], [#allocation2]
  %12 = dma.done [#allocation2], 16
  %13 = sfence
  $region1: #{branch_1_fun.1} parent=0
    #allocation4 [shape = 'u8[8192]{0}', space=vmem, size = 0x2000, scoped, tag = 'output window, operand 0']
    #allocation5 [shape = 's32[2]{0}', space=sflag, size = 0x8, scoped, tag = 'scoped memory for branch_1_fun.1']
    %14 = vsyncpa [#allocation5], 0
    %s15 = scalar_lea.sflag [#allocation5], 1
    %16 = vsyncpa %s15, 0
    loop: start=0, step=1, limit=4
    $region2: #{branch_1_fun.1} parent=1 // loop_pre_header
      _
    $region3: #{branch_1_fun.1} parent=1 // loop_header
      %s18 = sphi 0, %s22
      %p19 = scmp.ge.s32.totalorder %s18, 4
      %s25 = sphi 0, %s37
      %s26 = sphi 0, %s33
      %s27 = sphi 0, %s25
      %s28 = sphi 0, %s26
      %s29 = sphi 0, %s27
      %s30 = sphi 0, %s28
      %s42 = sphi 0, %s44
      %s45 = sphi 0, %s42
      %s46 = sphi 0, %s45
      %s62 = sphi 0, %s46
      %s66 = sphi 0, %s66
      %s68 = sphi 0, %s66
      %s69 = sphi 0, %s68
      %s83 = sphi 0, %s69
      %s91 = sphi 0, %s93
      %s94 = sphi 0, %s91
      %s95 = sphi 0, %s94
      %s111 = sphi 0, %s95
    $region4: #{branch_1_fun.1} parent=1 // loop_header_branch
      %21 = sbr.rel (%p19) target = $region8
    $region5: #{branch_1_fun.1} parent=1 // loop_body
      %s23 = ssub.s32 %s18, 1
      %s24 = ssub.s32 %s18, 2
      %s31 = sadd.s32 1, %s26
      %p32 = scmp.ge.s32.totalorder %s31, 1
      %s33 = scalar_select %p32, 0, %s31
      %s34 = sadd.s32 1, %s25
      %s35 = scalar_select %p32, %s34, %s25
      %p36 = scmp.ge.s32.totalorder %s35, 2
      %s37 = scalar_select %p36, 0, %s35
      %s38 = ssub.s32 %s25, %s37
      %s39 = ssub.s32 %s26, %s33
      %s40 = sor.u32 %s38, %s39
      %p41 = scmp.eq.s32.totalorder %s40, 0
      %s43 = sadd.s32 %s42, 1
      %s44 = scalar_select %p41, %s42, %s43
      %p47 = pneg %p41
      %p48 = scmp.eq.s32.totalorder %s18, 1
      %p49 = por %p47, %p48
      %p50 = scmp.ne.s32.totalorder %s42, %s45
      %p51 = scmp.eq.s32.totalorder %s18, 0
      %p52 = por %p50, %p51
      %p53 = scmp.ne.s32.totalorder %s42, %s45
      %p54 = scmp.eq.s32.totalorder %s23, 1
      %p55 = por %p53, %p54
      %p56 = scmp.ne.s32.totalorder %s45, %s46
      %p57 = scmp.eq.s32.totalorder %s23, 0
      %p58 = por %p56, %p57
      %p59 = scmp.ne.s32.totalorder %s45, %s46
      %p60 = scmp.eq.s32.totalorder %s24, 1
      %p61 = por %p59, %p60
      %p63 = scmp.ne.s32.totalorder %s46, %s62
      %p64 = scmp.eq.s32.totalorder %s24, 0
      %p65 = por %p63, %p64
      %s67 = sadd.s32 %s66, 1
      %p70 = scmp.eq.s32.totalorder %s18, 1
      %p71 = scmp.ne.s32.totalorder %s66, %s68
      %p72 = scmp.eq.s32.totalorder %s18, 0
      %p73 = por %p71, %p72
      %p74 = scmp.ne.s32.totalorder %s66, %s68
      %p75 = scmp.eq.s32.totalorder %s23, 1
      %p76 = por %p74, %p75
      %p77 = scmp.ne.s32.totalorder %s68, %s69
      %p78 = scmp.eq.s32.totalorder %s23, 0
      %p79 = por %p77, %p78
      %p80 = scmp.ne.s32.totalorder %s68, %s69
      %p81 = scmp.eq.s32.totalorder %s24, 1
      %p82 = por %p80, %p81
      %p84 = scmp.ne.s32.totalorder %s69, %s83
      %p85 = scmp.eq.s32.totalorder %s24, 0
      %p86 = por %p84, %p85
      %s87 = ssub.s32 %s25, %s37
      %s88 = ssub.s32 %s26, %s33
      %s89 = sor.u32 %s87, %s88
      %p90 = scmp.eq.s32.totalorder %s89, 0
      %s92 = sadd.s32 %s91, 1
      %s93 = scalar_select %p90, %s91, %s92
      %p96 = pneg %p90
      %p97 = scmp.eq.s32.totalorder %s18, 1
      %p98 = por %p96, %p97
      %p99 = scmp.ne.s32.totalorder %s91, %s94
      %p100 = scmp.eq.s32.totalorder %s18, 0
      %p101 = por %p99, %p100
      %p102 = scmp.ne.s32.totalorder %s91, %s94
      %p103 = scmp.eq.s32.totalorder %s23, 1
      %p104 = por %p102, %p103
      %p105 = scmp.ne.s32.totalorder %s94, %s95
      %p106 = scmp.eq.s32.totalorder %s23, 0
      %p107 = por %p105, %p106
      %p108 = scmp.ne.s32.totalorder %s94, %s95
      %p109 = scmp.eq.s32.totalorder %s24, 1
      %p110 = por %p108, %p109
      %p112 = scmp.ne.s32.totalorder %s95, %s111
      %p113 = scmp.eq.s32.totalorder %s24, 0
      %p114 = por %p112, %p113
      %p115 = scmp.le.s32.totalorder 1, %s18
      %p116 = scmp.lt.s32.totalorder %s18, 3
      %p117 = pnand %p115, %p116
      %p118 = pneg %p117
      // Predicated region
      $region9: #{branch_1_fun.1} parent=5 // pred_check
        _
      $region10: #{branch_1_fun.1} parent=5 // pred_check_branch
        %120 = sbr.rel (%p117) target = $region12
      $region11: #{branch_1_fun.1} parent=5 // pred_region
        %s121 = ssub.s32 %s18, 1
        // Predicated region
        $region13: #{branch_1_fun.1} parent=11 // pred_check
          %p122 = pneg %p79
        $region14: #{branch_1_fun.1} parent=11 // pred_check_branch
          %124 = sbr.rel (%p122) target = $region16
        $region15: #{branch_1_fun.1} parent=11 // pred_region
          _
        $region16: #{branch_1_fun.1} parent=11 // pred_fallthru
          _
      $region12: #{branch_1_fun.1} parent=5 // pred_fallthru
        _
      %p125 = scmp.lt.s32.totalorder %s18, 2
      // Predicated region
      $region17: #{branch_1_fun.1} parent=5 // pred_check
        %p126 = pneg %p125
      $region18: #{branch_1_fun.1} parent=5 // pred_check_branch
        %128 = sbr.rel (%p126) target = $region20
      $region19: #{branch_1_fun.1} parent=5 // pred_region
        // Predicated region
        $region21: #{branch_1_fun.1} parent=19 // pred_check
          %p129 = pneg %p52
        $region22: #{branch_1_fun.1} parent=19 // pred_check_branch
          %131 = sbr.rel (%p129) target = $region24
        $region23: #{branch_1_fun.1} parent=19 // pred_region
          %p132 = scmp.lt.s32.totalorder %s25, 1
          %s133 = scalar_select %p132, %s25, 1
          %p134 = scmp.lt.s32.totalorder %s26, 0
          %s135 = scalar_select %p134, %s26, 0
          %s136 = sadd.s32 %s135, %s133
          %s137 = smul.addr %s136, 8
          %s138 = scalar_lea.vmem %s1, %s137
        $region24: #{branch_1_fun.1} parent=19 // pred_fallthru
          _
      $region20: #{branch_1_fun.1} parent=5 // pred_fallthru
        _
      %p139 = scmp.le.s32.totalorder 1, %s18
      %p140 = scmp.lt.s32.totalorder %s18, 3
      %p141 = pnand %p139, %p140
      %p142 = pneg %p141
      // Predicated region
      $region25: #{branch_1_fun.1} parent=5 // pred_check
        _
      $region26: #{branch_1_fun.1} parent=5 // pred_check_branch
        %144 = sbr.rel (%p141) target = $region28
      $region27: #{branch_1_fun.1} parent=5 // pred_region
        %s145 = ssub.s32 %s18, 1
        %p146 = scmp.lt.s32.totalorder %s27, 1
        %s147 = scalar_select %p146, %s27, 1
        %p148 = scmp.lt.s32.totalorder %s28, 0
        %s149 = scalar_select %p148, %s28, 0
        %s150 = sadd.s32 %s149, %s147
        %s151 = smul.addr %s150, 8
        %s152 = scalar_lea.vmem %s1, %s151
        %p153 = pneg %p58
        %p154 = pneg %p55
        %p155 = pneg %p79
        %p156 = pneg %p76
        %p157 = pneg %p107
        %p158 = pneg %p104
        %s159 = sand.u32 %s94, 1
        %s160 = scalar_lea.sflag [#allocation5], %s159
        %s161 = sand.u32 %s94, 1
        %s162 = smul.addr %s161, 8
        %s163 = scalar_lea.vmem [#allocation4], %s162
        %p164 = scmp.lt.s32.totalorder %s27, 1
        %s165 = scalar_select %p164, %s27, 1
        %p166 = scmp.lt.s32.totalorder %s28, 0
        %s167 = scalar_select %p166, %s28, 0
        %s168 = sadd.s32 %s167, %s165
        %s169 = smul.addr %s168, 8
        %s170 = scalar_lea.vmem %s1, %s169
        %s171 = sld [smem:[#allocation3]]
        %s172 = sadd.s32 %s27, 1
        %s173 = sld [smem:[#allocation3 + %s172]]
        %p174 = scmp.eq.s32.totalorder %s173, 0
        // Predicated region
        $region29: #{branch_1_fun.1} parent=27 // pred_check
          %p175 = pneg %p174
        $region30: #{branch_1_fun.1} parent=27 // pred_check_branch
          %177 = sbr.rel (%p175) target = $region32
        $region31: #{branch_1_fun.1} parent=27 // pred_region
          %v178 = vld [vmem:[%s170] sm:$0xff]
          %179 = vst [vmem:[%s163] sm:$0xff] %v178
        $region32: #{branch_1_fun.1} parent=27 // pred_fallthru
          _
        %p180 = scmp.ne.s32.totalorder %s173, 0
        %p181 = scmp.eq.s32.totalorder %s171, 0
        %p182 = pnand %p180, %p181
        %p183 = pneg %p182
        // Predicated region
        $region33: #{branch_1_fun.1} parent=27 // pred_check
          _
        $region34: #{branch_1_fun.1} parent=27 // pred_check_branch
          %185 = sbr.rel (%p182) target = $region36
        $region35: #{branch_1_fun.1} parent=27 // pred_region
          %v186 = vld [vmem:[%s2] sm:$0x1]
          %v187 = vld [vmem:[%s170] sm:$0xff]
          %v189 = vlaneseq
          %v190 = vshrl.u32 %v189, 7
          %v191 = vsub.s32 0, %v190
          %v192 = vrot.slane %v186, %v191
          %v194 = vadd.f32 %v187, %v192
          %195 = vst [vmem:[%s163] sm:$0xff] %v194
        $region36: #{branch_1_fun.1} parent=27 // pred_fallthru
          _
        %p196 = scmp.ne.s32.totalorder %s171, 0
        %p197 = pnand %p180, %p196
        %p198 = pneg %p197
        // Predicated region
        $region37: #{branch_1_fun.1} parent=27 // pred_check
          _
        $region38: #{branch_1_fun.1} parent=27 // pred_check_branch
          %200 = sbr.rel (%p197) target = $region40
        $region39: #{branch_1_fun.1} parent=27 // pred_region
          %v201 = vld [vmem:[%s170] sm:$0xff]
          %v202 = vld [vmem:[%s2] sm:$0x1]
          %v204 = vlaneseq
          %v205 = vshrl.u32 %v204, 7
          %v206 = vsub.s32 0, %v205
          %v207 = vrot.slane %v202, %v206
          %v209 = vadd.f32 %v201, %v207
          %v210 = vmul.f32 %v201, %v201
          %211 = vadd.xlane.f32.xlu0 %v210
          %v212 = vpop.xlane.xlu0 %211
          %v213 = vmul.f32 %v201, %v207
          %214 = vadd.xlane.f32.xlu0 %v213
          %v215 = vpop.xlane.xlu0 %214
          %v216 = vmul.f32 %v215, 2.0
          %v217 = vadd.f32 %v212, %v216
          %v218 = vmul.f32 %v202, %v202
          %vm219 = vcmask 1040384
          %v220 = vsel %vm219, %v218, 0.0
          %221 = vadd.xlane.f32.xlu0 %v220
          %v222 = vpop.xlane.xlu0 %221
          %v223 = vrot.slane %v222, 4
          %v224 = vadd.f32 %v222, %v223
          %v225 = vrot.slane %v224, 2
          %v226 = vadd.f32 %v224, %v225
          %v227 = vrot.slane %v226, 1
          %v228 = vadd.f32 %v226, %v227
          %s229 = vtos %v228
          %v230 = vstv %s229
          %v231 = vadd.f32 %v217, %v230
          %v232 = vrsqrt.pop %v212
          %v233 = vmul.f32 %v212, %v232
          %vm234 = vcmp.eq.f32.partialorder %v212, inf
          %v235 = vsel %vm234, %v212, %v233
          %vm236 = vcmp.eq.f32.partialorder %v212, 0.0
          %v237 = vand.u32 %v212, 2147483648
          %v238 = vsel %vm236, %v237, %v235
          %v239 = vrsqrt.pop %v231
          %v240 = vmul.f32 %v238, %v239
          %v241 = vmul.f32 %v209, %v240
          %242 = vst [vmem:[%s163] sm:$0xff] %v241
        $region40: #{branch_1_fun.1} parent=27 // pred_fallthru
          _
        %s243 = sand.u32 %s94, 1
        %s244 = scalar_lea.sflag [#allocation5], %s243
        %s245 = sand.u32 %s94, 1
        %s246 = smul.addr %s245, 8
        %s247 = scalar_lea.vmem [#allocation4], %s246
        // Predicated region
        $region41: #{branch_1_fun.1} parent=27 // pred_check
          %p248 = pneg %p104
        $region42: #{branch_1_fun.1} parent=27 // pred_check_branch
          %250 = sbr.rel (%p248) target = $region44
        $region43: #{branch_1_fun.1} parent=27 // pred_region
          %s252 = ssub.s32 128, 128
          %253 = vsyncadd %s244, %s252
          %s254 = sadd.s32 %s28, %s27
          %s255 = smul.addr %s254, 128
          %s256 = scalar_lea.hbm %s3, %s255
          %s258 = sshll.u32 %s247, 4
          %s259 = int_to_ptr.vmem [resolvable:$true] %s258
          %261 = dma.vmem_to_hbm [thread:$0]  %s259, 128, %s256, %s244
        $region44: #{branch_1_fun.1} parent=27 // pred_fallthru
          _
      $region28: #{branch_1_fun.1} parent=5 // pred_fallthru
        _
      %p262 = scmp.le.s32.totalorder 2, %s18
      // Predicated region
      $region45: #{branch_1_fun.1} parent=5 // pred_check
        %p263 = pneg %p262
      $region46: #{branch_1_fun.1} parent=5 // pred_check_branch
        %265 = sbr.rel (%p263) target = $region48
      $region47: #{branch_1_fun.1} parent=5 // pred_region
        %s266 = ssub.s32 %s18, 2
        // Predicated region
        $region49: #{branch_1_fun.1} parent=47 // pred_check
          %p267 = pneg %p110
        $region50: #{branch_1_fun.1} parent=47 // pred_check_branch
          %269 = sbr.rel (%p267) target = $region52
        $region51: #{branch_1_fun.1} parent=47 // pred_region
          %s270 = sand.u32 %s95, 1
          %s271 = scalar_lea.sflag [#allocation5], %s270
          %s272 = sand.u32 %s95, 1
          %s273 = smul.addr %s272, 8
          %s274 = scalar_lea.vmem [#allocation4], %s273
          %275 = dma.done %s271, 128
        $region52: #{branch_1_fun.1} parent=47 // pred_fallthru
          _
      $region48: #{branch_1_fun.1} parent=5 // pred_fallthru
        _
    $region6: #{branch_1_fun.1} parent=1 // loop_footer
      %s22 = sadd.s32 1, %s18
    $region7: #{branch_1_fun.1} parent=1 // loop_footer_branch
      %17 = sbr.rel target = $region3
    $region8: #{branch_1_fun.1} parent=1 // loop_exit
      _
    %276 = vsyncpa [#allocation5], 1
    %s277 = scalar_lea.sflag [#allocation5], 1
    %278 = vsyncpa %s277, 1

// kernel: leash_forward.1
$region0: #{leash_forward.1}
  #allocation0 [shape = 'u32[]', space=smem, size = 0x4, offset = 0x4, fixed_abs, tag = 'smem constant byte address 0x4 - core index']
  #allocation1 [shape = 'u32[144,128]{1,0:T(1,128)}', space=vmem, size = 0x12000, scoped, tag = 'internal scratch']
  %s0 = inlined_call_operand.vmem [shape: f32[2,8,128], index: 0, kind: input, shape index: {}]
  %s1 = inlined_call_operand.vmem [shape: f32[1,128], index: 1, kind: input, shape index: {}]
  %s2 = inlined_call_operand.vmem [shape: f32[2,1,128], index: 2, kind: output, shape index: {0}]
  %s3 = inlined_call_operand.vmem [shape: f32[2,1,1], index: 3, kind: output, shape index: {1}]
  %s4 = inlined_call_operand.vmem [shape: f32[2,1,1], index: 4, kind: output, shape index: {2}]
  %5 = xla_tuple %s2, %s3, %s4
  %s6 = sld [smem:[#allocation0]]
  $region61: #{leash_forward.1} parent=0
    _
  %s8 = ssub.s32 1, %s6
  %s9 = scalar_select 0, %s8, %s6
  loop: start=0, step=1, limit=4
  $region2: #{leash_forward.1} parent=0 // loop_pre_header
    _
  $region3: #{leash_forward.1} parent=0 // loop_header
    %s11 = sphi 0, %s15
    %p12 = scmp.ge.s32.totalorder %s11, 4
    %s18 = sphi 0, %s30
    %s19 = sphi 0, %s26
    %s20 = sphi 0, %s18
    %s21 = sphi 0, %s19
    %s22 = sphi 0, %s20
    %s23 = sphi 0, %s21
    %s35 = sphi 0, %s37
    %s38 = sphi 0, %s35
    %s39 = sphi 0, %s38
    %s55 = sphi 0, %s39
    %s59 = sphi 0, %s59
    %s61 = sphi 0, %s59
    %s62 = sphi 0, %s61
    %s76 = sphi 0, %s62
    %s82 = sphi 0, %s84
    %s85 = sphi 0, %s82
    %s86 = sphi 0, %s85
    %s102 = sphi 0, %s86
    %s108 = sphi 0, %s110
    %s111 = sphi 0, %s108
    %s112 = sphi 0, %s111
    %s128 = sphi 0, %s112
    %s134 = sphi 0, %s136
    %s137 = sphi 0, %s134
    %s138 = sphi 0, %s137
    %s154 = sphi 0, %s138
  $region4: #{leash_forward.1} parent=0 // loop_header_branch
    %14 = sbr.rel (%p12) target = $region8
  $region5: #{leash_forward.1} parent=0 // loop_body
    %s16 = ssub.s32 %s11, 1
    %s17 = ssub.s32 %s11, 2
    %s24 = sadd.s32 1, %s19
    %p25 = scmp.ge.s32.totalorder %s24, 1
    %s26 = scalar_select %p25, 0, %s24
    %s27 = sadd.s32 1, %s18
    %s28 = scalar_select %p25, %s27, %s18
    %p29 = scmp.ge.s32.totalorder %s28, 2
    %s30 = scalar_select %p29, 0, %s28
    %s31 = ssub.s32 %s18, %s30
    %s32 = ssub.s32 %s19, %s26
    %s33 = sor.u32 %s31, %s32
    %p34 = scmp.eq.s32.totalorder %s33, 0
    %s36 = sadd.s32 %s35, 1
    %s37 = scalar_select %p34, %s35, %s36
    %p40 = pneg %p34
    %p41 = scmp.eq.s32.totalorder %s11, 1
    %p42 = por %p40, %p41
    %p43 = scmp.ne.s32.totalorder %s35, %s38
    %p44 = scmp.eq.s32.totalorder %s11, 0
    %p45 = por %p43, %p44
    %p46 = scmp.ne.s32.totalorder %s35, %s38
    %p47 = scmp.eq.s32.totalorder %s16, 1
    %p48 = por %p46, %p47
    %p49 = scmp.ne.s32.totalorder %s38, %s39
    %p50 = scmp.eq.s32.totalorder %s16, 0
    %p51 = por %p49, %p50
    %p52 = scmp.ne.s32.totalorder %s38, %s39
    %p53 = scmp.eq.s32.totalorder %s17, 1
    %p54 = por %p52, %p53
    %p56 = scmp.ne.s32.totalorder %s39, %s55
    %p57 = scmp.eq.s32.totalorder %s17, 0
    %p58 = por %p56, %p57
    %s60 = sadd.s32 %s59, 1
    %p63 = scmp.eq.s32.totalorder %s11, 1
    %p64 = scmp.ne.s32.totalorder %s59, %s61
    %p65 = scmp.eq.s32.totalorder %s11, 0
    %p66 = por %p64, %p65
    %p67 = scmp.ne.s32.totalorder %s59, %s61
    %p68 = scmp.eq.s32.totalorder %s16, 1
    %p69 = por %p67, %p68
    %p70 = scmp.ne.s32.totalorder %s61, %s62
    %p71 = scmp.eq.s32.totalorder %s16, 0
    %p72 = por %p70, %p71
    %p73 = scmp.ne.s32.totalorder %s61, %s62
    %p74 = scmp.eq.s32.totalorder %s17, 1
    %p75 = por %p73, %p74
    %p77 = scmp.ne.s32.totalorder %s62, %s76
    %p78 = scmp.eq.s32.totalorder %s17, 0
    %p79 = por %p77, %p78
    %s80 = ssub.s32 %s18, %s30
    %p81 = scmp.eq.s32.totalorder %s80, 0
    %s83 = sadd.s32 %s82, 1
    %s84 = scalar_select %p81, %s82, %s83
    %p87 = pneg %p81
    %p88 = scmp.eq.s32.totalorder %s11, 1
    %p89 = por %p87, %p88
    %p90 = scmp.ne.s32.totalorder %s82, %s85
    %p91 = scmp.eq.s32.totalorder %s11, 0
    %p92 = por %p90, %p91
    %p93 = scmp.ne.s32.totalorder %s82, %s85
    %p94 = scmp.eq.s32.totalorder %s16, 1
    %p95 = por %p93, %p94
    %p96 = scmp.ne.s32.totalorder %s85, %s86
    %p97 = scmp.eq.s32.totalorder %s16, 0
    %p98 = por %p96, %p97
    %p99 = scmp.ne.s32.totalorder %s85, %s86
    %p100 = scmp.eq.s32.totalorder %s17, 1
    %p101 = por %p99, %p100
    %p103 = scmp.ne.s32.totalorder %s86, %s102
    %p104 = scmp.eq.s32.totalorder %s17, 0
    %p105 = por %p103, %p104
    %s106 = ssub.s32 %s18, %s30
    %p107 = scmp.eq.s32.totalorder %s106, 0
    %s109 = sadd.s32 %s108, 1
    %s110 = scalar_select %p107, %s108, %s109
    %p113 = pneg %p107
    %p114 = scmp.eq.s32.totalorder %s11, 1
    %p115 = por %p113, %p114
    %p116 = scmp.ne.s32.totalorder %s108, %s111
    %p117 = scmp.eq.s32.totalorder %s11, 0
    %p118 = por %p116, %p117
    %p119 = scmp.ne.s32.totalorder %s108, %s111
    %p120 = scmp.eq.s32.totalorder %s16, 1
    %p121 = por %p119, %p120
    %p122 = scmp.ne.s32.totalorder %s111, %s112
    %p123 = scmp.eq.s32.totalorder %s16, 0
    %p124 = por %p122, %p123
    %p125 = scmp.ne.s32.totalorder %s111, %s112
    %p126 = scmp.eq.s32.totalorder %s17, 1
    %p127 = por %p125, %p126
    %p129 = scmp.ne.s32.totalorder %s112, %s128
    %p130 = scmp.eq.s32.totalorder %s17, 0
    %p131 = por %p129, %p130
    %s132 = ssub.s32 %s18, %s30
    %p133 = scmp.eq.s32.totalorder %s132, 0
    %s135 = sadd.s32 %s134, 1
    %s136 = scalar_select %p133, %s134, %s135
    %p139 = pneg %p133
    %p140 = scmp.eq.s32.totalorder %s11, 1
    %p141 = por %p139, %p140
    %p142 = scmp.ne.s32.totalorder %s134, %s137
    %p143 = scmp.eq.s32.totalorder %s11, 0
    %p144 = por %p142, %p143
    %p145 = scmp.ne.s32.totalorder %s134, %s137
    %p146 = scmp.eq.s32.totalorder %s16, 1
    %p147 = por %p145, %p146
    %p148 = scmp.ne.s32.totalorder %s137, %s138
    %p149 = scmp.eq.s32.totalorder %s16, 0
    %p150 = por %p148, %p149
    %p151 = scmp.ne.s32.totalorder %s137, %s138
    %p152 = scmp.eq.s32.totalorder %s17, 1
    %p153 = por %p151, %p152
    %p155 = scmp.ne.s32.totalorder %s138, %s154
    %p156 = scmp.eq.s32.totalorder %s17, 0
    %p157 = por %p155, %p156
    %p158 = scmp.le.s32.totalorder 1, %s11
    %p159 = scmp.lt.s32.totalorder %s11, 3
    %p160 = pnand %p158, %p159
    %p161 = pneg %p160
    // Predicated region
    $region9: #{leash_forward.1} parent=5 // pred_check
      _
    $region10: #{leash_forward.1} parent=5 // pred_check_branch
      %163 = sbr.rel (%p160) target = $region12
    $region11: #{leash_forward.1} parent=5 // pred_region
      %s164 = ssub.s32 %s11, 1
      // Predicated region
      $region13: #{leash_forward.1} parent=11 // pred_check
        %p165 = pneg %p72
      $region14: #{leash_forward.1} parent=11 // pred_check_branch
        %167 = sbr.rel (%p165) target = $region16
      $region15: #{leash_forward.1} parent=11 // pred_region
        _
      $region16: #{leash_forward.1} parent=11 // pred_fallthru
        _
    $region12: #{leash_forward.1} parent=5 // pred_fallthru
      _
    %p168 = scmp.lt.s32.totalorder %s11, 2
    // Predicated region
    $region17: #{leash_forward.1} parent=5 // pred_check
      %p169 = pneg %p168
    $region18: #{leash_forward.1} parent=5 // pred_check_branch
      %171 = sbr.rel (%p169) target = $region20
    $region19: #{leash_forward.1} parent=5 // pred_region
      // Predicated region
      $region21: #{leash_forward.1} parent=19 // pred_check
        %p172 = pneg %p45
      $region22: #{leash_forward.1} parent=19 // pred_check_branch
        %174 = sbr.rel (%p172) target = $region24
      $region23: #{leash_forward.1} parent=19 // pred_region
        %p175 = scmp.lt.s32.totalorder %s18, 1
        %s176 = scalar_select %p175, %s18, 1
        %p177 = scmp.lt.s32.totalorder %s19, 0
        %s178 = scalar_select %p177, %s19, 0
        %s179 = sadd.s32 %s178, %s176
        %s180 = smul.addr %s179, 8
        %s181 = scalar_lea.vmem %s0, %s180
      $region24: #{leash_forward.1} parent=19 // pred_fallthru
        _
    $region20: #{leash_forward.1} parent=5 // pred_fallthru
      _
    %p182 = scmp.le.s32.totalorder 1, %s11
    %p183 = scmp.lt.s32.totalorder %s11, 3
    %p184 = pnand %p182, %p183
    %p185 = pneg %p184
    // Predicated region
    $region25: #{leash_forward.1} parent=5 // pred_check
      _
    $region26: #{leash_forward.1} parent=5 // pred_check_branch
      %187 = sbr.rel (%p184) target = $region28
    $region27: #{leash_forward.1} parent=5 // pred_region
      %s188 = ssub.s32 %s11, 1
      %p189 = scmp.lt.s32.totalorder %s20, 1
      %s190 = scalar_select %p189, %s20, 1
      %p191 = scmp.lt.s32.totalorder %s21, 0
      %s192 = scalar_select %p191, %s21, 0
      %s193 = sadd.s32 %s192, %s190
      %s194 = smul.addr %s193, 8
      %s195 = scalar_lea.vmem %s0, %s194
      %p196 = pneg %p51
      %p197 = pneg %p48
      %p198 = pneg %p72
      %p199 = pneg %p69
      %p200 = pneg %p98
      %p201 = pneg %p95
      %p202 = scmp.lt.s32.totalorder %s20, 1
      %s203 = scalar_select %p202, %s20, 1
      %s204 = scalar_lea.vmem %s2, %s203
      %p205 = pneg %p124
      %p206 = pneg %p121
      %p207 = scmp.lt.s32.totalorder %s20, 1
      %s208 = scalar_select %p207, %s20, 1
      %s209 = scalar_lea.vmem %s3, %s208
      %p210 = pneg %p150
      %p211 = pneg %p147
      %p212 = scmp.lt.s32.totalorder %s20, 1
      %s213 = scalar_select %p212, %s20, 1
      %s214 = scalar_lea.vmem %s4, %s213
      %p215 = scmp.lt.s32.totalorder %s20, 1
      %s216 = scalar_select %p215, %s20, 1
      %p217 = scmp.lt.s32.totalorder %s21, 0
      %s218 = scalar_select %p217, %s21, 0
      %s219 = sadd.s32 %s218, %s216
      %s220 = smul.addr %s219, 8
      %s221 = scalar_lea.vmem %s0, %s220
      %p222 = scmp.lt.s32.totalorder %s20, 1
      %s223 = scalar_select %p222, %s20, 1
      %s224 = scalar_lea.vmem %s2, %s223
      %p225 = scmp.lt.s32.totalorder %s20, 1
      %s226 = scalar_select %p225, %s20, 1
      %s227 = scalar_lea.vmem %s3, %s226
      %p228 = scmp.lt.s32.totalorder %s20, 1
      %s229 = scalar_select %p228, %s20, 1
      %s230 = scalar_lea.vmem %s4, %s229
      %v231 = vld [vmem:[%s221] sm:$0xff]
      %v232 = vld [vmem:[%s1] sm:$0x1]
      %v233 = vrot.slane %v231, 4
      %v234 = vadd.f32 %v231, %v233
      %v235 = vrot.slane %v234, 2
      %v236 = vadd.f32 %v234, %v235
      %v237 = vrot.slane %v236, 1
      %v238 = vadd.f32 %v236, %v237
      %v239 = vmul.f32 %v231, %v231
      %240 = vadd.xlane.f32.xlu0 %v239
      %v241 = vpop.xlane.xlu0 %240
      %v243 = vlaneseq
      %v244 = vshrl.u32 %v243, 7
      %v245 = vsub.s32 0, %v244
      %v246 = vrot.slane %v232, %v245
      %v248 = vmul.f32 %v231, %v246
      %249 = vadd.xlane.f32.xlu0 %v248
      %v250 = vpop.xlane.xlu0 %249
      %v251 = vmul.f32 %v232, %v232
      %vm252 = vcmask 1040384
      %v253 = vsel %vm252, %v251, 0.0
      %254 = vadd.xlane.f32.xlu0 %v253
      %v255 = vpop.xlane.xlu0 %254
      %v256 = vrot.slane %v255, 4
      %v257 = vadd.f32 %v255, %v256
      %v258 = vrot.slane %v257, 2
      %v259 = vadd.f32 %v257, %v258
      %v260 = vrot.slane %v259, 1
      %v261 = vadd.f32 %v259, %v260
      %s262 = vtos %v261
      %v263 = vmul.f32 %v250, 2.0
      %v264 = vstv %s262
      %v265 = vadd.f32 %v263, %v264
      %v266 = vadd.f32 %v241, %v265
      %vm267 = vweird.f32 %v266
      %vm268 = vmxor %vm267, 1
      %v269 = vsel %vm268, %v265, inf
      %vm270 = vweird.f32 %v241
      %vm271 = vmxor %vm270, 1
      %v272 = vsel %vm271, 0.0, 1.0
      %v273 = vrot.slane %v269, 4
      %v274 = vmax.f32 %v269, %v273
      %v275 = vrot.slane %v274, 2
      %v276 = vmax.f32 %v274, %v275
      %v277 = vrot.slane %v276, 1
      %v278 = vmax.f32 %v276, %v277
      %v279 = vrot.slane %v272, 4
      %v280 = vmax.f32 %v272, %v279
      %v281 = vrot.slane %v280, 2
      %v282 = vmax.f32 %v280, %v281
      %v283 = vrot.slane %v282, 1
      %v284 = vmax.f32 %v282, %v283
      %p285 = scmp.eq.s32.totalorder %s21, 0
      // Predicated region
      $region29: #{leash_forward.1} parent=27 // pred_check
        %p286 = pneg %p285
      $region30: #{leash_forward.1} parent=27 // pred_check_branch
        %288 = sbr.rel (%p286) target = $region32
      $region31: #{leash_forward.1} parent=27 // pred_region
        %289 = vst [vmem:[%s224] sm:$0x1] 0.0
        %vm290 = vcmask 0
        %291 = vst.msk [vmem:[%s227] sm:$0x1] %vm290, -inf
        %292 = vst.msk [vmem:[%s230] sm:$0x1] %vm290, 0.0
      $region32: #{leash_forward.1} parent=27 // pred_fallthru
        _
      %v293 = vld [vmem:[%s224] sm:$0x1]
      %v294 = vadd.f32 %v293, %v238
      %295 = vst [vmem:[%s224] sm:$0x1] %v294
      %v296 = vld [vmem:[%s227] sm:$0x1]
      %v297 = vmax.f32 %v296, %v278
      %vm298 = vcmask 0
      %299 = vst.msk [vmem:[%s227] sm:$0x1] %vm298, %v297
      %v300 = vld [vmem:[%s230] sm:$0x1]
      %v301 = vmax.f32 %v300, %v284
      %302 = vst.msk [vmem:[%s230] sm:$0x1] %vm298, %v301
      %p303 = scmp.lt.s32.totalorder %s20, 1
      %s304 = scalar_select %p303, %s20, 1
      %s305 = scalar_lea.vmem %s2, %s304
      %p306 = scmp.lt.s32.totalorder %s20, 1
      %s307 = scalar_select %p306, %s20, 1
      %s308 = scalar_lea.vmem %s3, %s307
      %p309 = scmp.lt.s32.totalorder %s20, 1
      %s310 = scalar_select %p309, %s20, 1
      %s311 = scalar_lea.vmem %s4, %s310
      // Predicated region
      $region33: #{leash_forward.1} parent=27 // pred_check
        %p312 = pneg %p95
      $region34: #{leash_forward.1} parent=27 // pred_check_branch
        %314 = sbr.rel (%p312) target = $region36
      $region35: #{leash_forward.1} parent=27 // pred_region
        _
      $region36: #{leash_forward.1} parent=27 // pred_fallthru
        _
      // Predicated region
      $region37: #{leash_forward.1} parent=27 // pred_check
        %p315 = pneg %p121
      $region38: #{leash_forward.1} parent=27 // pred_check_branch
        %317 = sbr.rel (%p315) target = $region40
      $region39: #{leash_forward.1} parent=27 // pred_region
        _
      $region40: #{leash_forward.1} parent=27 // pred_fallthru
        _
      // Predicated region
      $region41: #{leash_forward.1} parent=27 // pred_check
        %p318 = pneg %p147
      $region42: #{leash_forward.1} parent=27 // pred_check_branch
        %320 = sbr.rel (%p318) target = $region44
      $region43: #{leash_forward.1} parent=27 // pred_region
        _
      $region44: #{leash_forward.1} parent=27 // pred_fallthru
        _
    $region28: #{leash_forward.1} parent=5 // pred_fallthru
      _
    %p321 = scmp.le.s32.totalorder 2, %s11
    // Predicated region
    $region45: #{leash_forward.1} parent=5 // pred_check
      %p322 = pneg %p321
    $region46: #{leash_forward.1} parent=5 // pred_check_branch
      %324 = sbr.rel (%p322) target = $region48
    $region47: #{leash_forward.1} parent=5 // pred_region
      %s325 = ssub.s32 %s11, 2
      // Predicated region
      $region49: #{leash_forward.1} parent=47 // pred_check
        %p326 = pneg %p101
      $region50: #{leash_forward.1} parent=47 // pred_check_branch
        %328 = sbr.rel (%p326) target = $region52
      $region51: #{leash_forward.1} parent=47 // pred_region
        %p329 = scmp.lt.s32.totalorder %s22, 1
        %s330 = scalar_select %p329, %s22, 1
        %s331 = scalar_lea.vmem %s2, %s330
      $region52: #{leash_forward.1} parent=47 // pred_fallthru
        _
      // Predicated region
      $region53: #{leash_forward.1} parent=47 // pred_check
        %p332 = pneg %p127
      $region54: #{leash_forward.1} parent=47 // pred_check_branch
        %334 = sbr.rel (%p332) target = $region56
      $region55: #{leash_forward.1} parent=47 // pred_region
        %p335 = scmp.lt.s32.totalorder %s22, 1
        %s336 = scalar_select %p335, %s22, 1
        %s337 = scalar_lea.vmem %s3, %s336
      $region56: #{leash_forward.1} parent=47 // pred_fallthru
        _
      // Predicated region
      $region57: #{leash_forward.1} parent=47 // pred_check
        %p338 = pneg %p153
      $region58: #{leash_forward.1} parent=47 // pred_check_branch
        %340 = sbr.rel (%p338) target = $region60
      $region59: #{leash_forward.1} parent=47 // pred_region
        %p341 = scmp.lt.s32.totalorder %s22, 1
        %s342 = scalar_select %p341, %s22, 1
        %s343 = scalar_lea.vmem %s4, %s342
      $region60: #{leash_forward.1} parent=47 // pred_fallthru
        _
    $region48: #{leash_forward.1} parent=5 // pred_fallthru
      _
  $region6: #{leash_forward.1} parent=0 // loop_footer
    %s15 = sadd.s32 1, %s11
  $region7: #{leash_forward.1} parent=0 // loop_footer_branch
    %10 = sbr.rel target = $region3
  $region8: #{leash_forward.1} parent=0 // loop_exit
    _

</llo_original>
